<compile_context>
chip_gen: v5e
topology: v5e:2x2
jax: 0.10.0
libtpu: 0.0.40
codegen_flags: <defaults>
</compile_context>

<pallas_src>
import jax
import jax.numpy as jnp
from jax.experimental import pallas as pl
from jax.experimental.pallas import tpu as pltpu

_SUBLANE = 8


def _round_up(n, m):
    return ((n + m - 1) // m) * m


def _learn_sequence_kernel(x_ref, w1_ref, b1_ref, w2_ref, b2_ref, o_ref):
    # x: [TB, in_dim]; w1: [in_dim, E]; b1: [1, E]; w2: [E, E]; b2: [1, E]
    # o: [TB, 1, E]  (seq dim from x.unsqueeze(1) is emitted directly)
    x = x_ref[...]
    # Linear 1 on the MXU, f32 accumulation; f32 bias + ReLU epilogue (VPU).
    h = jnp.dot(x, w1_ref[...], preferred_element_type=jnp.float32) + b1_ref[...]
    h = jnp.maximum(h, 0.0)
    # TODO(synk): Dropout omitted (identity in eval mode); training-mode would
    # need pltpu.prng_seed / pltpu.prng_random_bits masking.
    # Linear 2 + bias + Tanh (tanh goes to the EUP slot).
    y = jnp.dot(h.astype(w2_ref.dtype), w2_ref[...],
                preferred_element_type=jnp.float32) + b2_ref[...]
    o_ref[...] = jnp.tanh(y)[:, None, :].astype(o_ref.dtype)


def learn_sequence_forward(x, w1, b1, w2, b2, *, block_b=4096,
                           use_bf16=True, out_dtype=jnp.float32):
    """x: [B, in_dim].  w1: [in_dim, emb], b1: [1|emb], w2: [emb, emb],
    b2: [1|emb].  Returns [B, 1, emb_dim]  (matches x.unsqueeze(1) path)."""
    B, in_dim = x.shape
    emb_dim = w1.shape[1]
    b1 = b1.reshape(1, emb_dim).astype(jnp.float32)
    b2 = b2.reshape(1, emb_dim).astype(jnp.float32)

    # bf16 matmul operands (MXU-native on v5e/v6e/v7x; halves x HBM bytes).
    # Accumulation and the epilogue stay f32 inside the kernel.
    if use_bf16:
        if x.dtype != jnp.bfloat16:
            x = x.astype(jnp.bfloat16)
        w1 = w1.astype(jnp.bfloat16)
        w2 = w2.astype(jnp.bfloat16)

    # Batch tile: large to amortize per-step overhead and get long contiguous
    # DMAs, capped at the (sublane-rounded) batch.  Non-divisible last block
    # handled by the grid; no batch padding, no post-kernel slice.
    tb = max(_SUBLANE, min(block_b, _round_up(B, _SUBLANE)))
    grid = (pl.cdiv(B, tb),)

    x_bytes = x.dtype.itemsize
    w_bytes = w1.dtype.itemsize
    o_bytes = jnp.dtype(out_dtype).itemsize

    # VMEM budget: double-buffered x/out tiles + resident weights/biases
    # (+ headroom).  Clamp to [16 MiB, 64 MiB] so it works under v5e's default
    # scoped limit and v7x's 64 MiB physical VMEM.
    vmem_needed = (2 * tb * (in_dim * x_bytes + emb_dim * o_bytes)
                   + 2 * ((in_dim + emb_dim) * emb_dim * w_bytes
                          + 2 * emb_dim * 4)
                   + (4 << 20))
    vmem_limit = int(min(max(vmem_needed, 16 << 20), 64 << 20))

    flops = 2 * B * (in_dim * emb_dim + emb_dim * emb_dim)
    transcendentals = B * emb_dim
    bytes_accessed = (B * in_dim * x_bytes
                      + (in_dim + emb_dim) * emb_dim * w_bytes
                      + 2 * emb_dim * 4
                      + B * emb_dim * o_bytes)

    out = pl.pallas_call(
        _learn_sequence_kernel,
        out_shape=jax.ShapeDtypeStruct((B, 1, emb_dim), out_dtype),
        grid_spec=pltpu.PrefetchScalarGridSpec(
            num_scalar_prefetch=0,
            grid=grid,
            in_specs=[
                pl.BlockSpec((tb, in_dim), lambda i: (i, 0)),        # x tile
                pl.BlockSpec((in_dim, emb_dim), lambda i: (0, 0)),   # w1 (resident)
                pl.BlockSpec((1, emb_dim), lambda i: (0, 0)),        # b1 (resident)
                pl.BlockSpec((emb_dim, emb_dim), lambda i: (0, 0)),  # w2 (resident)
                pl.BlockSpec((1, emb_dim), lambda i: (0, 0)),        # b2 (resident)
            ],
            out_specs=pl.BlockSpec((tb, 1, emb_dim), lambda i: (i, 0, 0)),
        ),
        compiler_params=pltpu.CompilerParams(
            dimension_semantics=("parallel",),
            vmem_limit_bytes=vmem_limit,
        ),
        cost_estimate=pl.CostEstimate(
            flops=flops,
            transcendentals=transcendentals,
            bytes_accessed=bytes_accessed,
        ),
    )(x, w1, b1, w2, b2)
    return out


def _ref_forward(x, w1, b1, w2, b2):
    h = jnp.maximum(x @ w1 + b1.reshape(1, -1), 0.0)
    y = jnp.tanh(h @ w2 + b2.reshape(1, -1))
    return y[:, None, :]


if __name__ == "__main__":
    # Small shapes consistent with the module.  B=50 deliberately does not
    # divide the tile so the non-divisible last grid block is exercised.
    B, in_dim, emb_dim = 50, 32, 64

    key = jax.random.PRNGKey(0)
    kx, k1, k2, k3, k4 = jax.random.split(key, 5)

    x = jax.random.normal(kx, (B, in_dim), dtype=jnp.float32)

    # Deterministic parameter init (uniform, nn.Linear-like scale).
    lim1 = 1.0 / jnp.sqrt(in_dim)
    lim2 = 1.0 / jnp.sqrt(emb_dim)
    w1 = jax.random.uniform(k1, (in_dim, emb_dim), jnp.float32, -lim1, lim1)
    b1 = jax.random.uniform(k2, (1, emb_dim), jnp.float32, -lim1, lim1)
    w2 = jax.random.uniform(k3, (emb_dim, emb_dim), jnp.float32, -lim2, lim2)
    b2 = jax.random.uniform(k4, (1, emb_dim), jnp.float32, -lim2, lim2)

    ref = _ref_forward(x, w1, b1, w2, b2)

    # Small block_b only to exercise the multi-step grid + partial last block
    # at this tiny demo batch; production default is block_b=4096.
    out_bf16 = learn_sequence_forward(x, w1, b1, w2, b2, block_b=16,
                                      use_bf16=True)
    out_bf16 = jax.block_until_ready(out_bf16)
    assert out_bf16.shape == (B, 1, emb_dim), out_bf16.shape
    assert jnp.allclose(out_bf16, ref, atol=4e-2, rtol=4e-2)

    # Exact f32 path.
    out_f32 = learn_sequence_forward(x, w1, b1, w2, b2, block_b=16,
                                     use_bf16=False)
    out_f32 = jax.block_until_ready(out_f32)
    assert out_f32.shape == (B, 1, emb_dim), out_f32.shape
    assert jnp.allclose(out_f32, ref, atol=1e-5, rtol=1e-5)

    print("KERNEL_OK")
</pallas_src>

<mosaic_0001>
module attributes {stable_mosaic.version = 11 : i64} {
  func.func @_learn_sequence_kernel(%arg0: i32, %arg1: memref<16x32xbf16, #tpu.memory_space<vmem>>, %arg2: memref<32x64xbf16, #tpu.memory_space<vmem>>, %arg3: memref<1x64xf32, #tpu.memory_space<vmem>>, %arg4: memref<64x64xbf16, #tpu.memory_space<vmem>>, %arg5: memref<1x64xf32, #tpu.memory_space<vmem>>, %arg6: memref<16x1x64xf32, #tpu.memory_space<vmem>>) attributes {dimension_semantics = [#tpu.dimension_semantics<parallel>], iteration_bounds = array<i64: 4>, scalar_prefetch = 0 : i64, scratch_operands = 0 : i64, tpu.core_type = #tpu.core_type<tc>, window_params = [{transform_indices = @transform_0, window_bounds = array<i64: 16, 32>}, {pipeline_mode = #tpu.pipeline_mode<synchronous>, transform_indices = @transform_1, window_bounds = array<i64: 32, 64>}, {pipeline_mode = #tpu.pipeline_mode<synchronous>, transform_indices = @transform_2, window_bounds = array<i64: 1, 64>}, {pipeline_mode = #tpu.pipeline_mode<synchronous>, transform_indices = @transform_3, window_bounds = array<i64: 64, 64>}, {pipeline_mode = #tpu.pipeline_mode<synchronous>, transform_indices = @transform_4, window_bounds = array<i64: 1, 64>}, {transform_indices = @transform_5, window_bounds = array<i64: 16, 1, 64>}]} {
    %c0 = arith.constant 0 : index
    %c0_0 = arith.constant 0 : index
    %0 = vector.load %arg1[%c0, %c0_0] : memref<16x32xbf16, #tpu.memory_space<vmem>>, vector<16x32xbf16>
    %c0_1 = arith.constant 0 : index
    %c0_2 = arith.constant 0 : index
    %1 = vector.load %arg2[%c0_1, %c0_2] : memref<32x64xbf16, #tpu.memory_space<vmem>>, vector<32x64xbf16>
    %cst = arith.constant dense<0.000000e+00> : vector<16x64xf32>
    %2 = tpu.matmul %0, %1, %cst {dimension_numbers = #tpu.dot_dimension_numbers<[1], [0], [0], [1], [0, 0, 1, 1], [], []>} : vector<16x32xbf16>, vector<32x64xbf16>, vector<16x64xf32> -> vector<16x64xf32>
    %c0_3 = arith.constant 0 : index
    %c0_4 = arith.constant 0 : index
    %3 = vector.load %arg3[%c0_3, %c0_4] : memref<1x64xf32, #tpu.memory_space<vmem>>, vector<1x64xf32>
    %4 = vector.broadcast %3 : vector<1x64xf32> to vector<16x64xf32>
    %5 = arith.addf %2, %4 : vector<16x64xf32>
    %cst_5 = arith.constant 0.000000e+00 : f32
    %6 = vector.broadcast %cst_5 : f32 to vector<16x64xf32>
    %7 = arith.maximumf %5, %6 : vector<16x64xf32>
    %8 = arith.truncf %7 : vector<16x64xf32> to vector<16x64xbf16>
    %c0_6 = arith.constant 0 : index
    %c0_7 = arith.constant 0 : index
    %9 = vector.load %arg4[%c0_6, %c0_7] : memref<64x64xbf16, #tpu.memory_space<vmem>>, vector<64x64xbf16>
    %cst_8 = arith.constant dense<0.000000e+00> : vector<16x64xf32>
    %10 = tpu.matmul %8, %9, %cst_8 {dimension_numbers = #tpu.dot_dimension_numbers<[1], [0], [0], [1], [0, 0, 1, 1], [], []>} : vector<16x64xbf16>, vector<64x64xbf16>, vector<16x64xf32> -> vector<16x64xf32>
    %c0_9 = arith.constant 0 : index
    %c0_10 = arith.constant 0 : index
    %11 = vector.load %arg5[%c0_9, %c0_10] : memref<1x64xf32, #tpu.memory_space<vmem>>, vector<1x64xf32>
    %12 = vector.broadcast %11 : vector<1x64xf32> to vector<16x64xf32>
    %13 = arith.addf %10, %12 : vector<16x64xf32>
    %14 = math.tanh %13 : vector<16x64xf32>
    %15 = vector.shape_cast %14 : vector<16x64xf32> to vector<16x1x64xf32>
    %c0_11 = arith.constant 0 : index
    %c0_12 = arith.constant 0 : index
    %c0_13 = arith.constant 0 : index
    %16 = vector.load %arg6[%c0_11, %c0_12, %c0_13] : memref<16x1x64xf32, #tpu.memory_space<vmem>>, vector<16x1x64xf32>
    tpu.vector_store %arg6[%c0_11, %c0_12, %c0_13], %15 {strides = array<i32>} : memref<16x1x64xf32, #tpu.memory_space<vmem>>, vector<16x1x64xf32>,
    return
  }
  func.func @transform_0(%arg0: i32) -> (i32, i32) {
    %c0_i32 = arith.constant 0 : i32
    %c0_i32_0 = arith.constant 0 : i32
    return %arg0, %c0_i32 : i32, i32
  }
  func.func @transform_1(%arg0: i32) -> (i32, i32) {
    %c0_i32 = arith.constant 0 : i32
    %c0_i32_0 = arith.constant 0 : i32
    %c0_i32_1 = arith.constant 0 : i32
    return %c0_i32, %c0_i32_0 : i32, i32
  }
  func.func @transform_2(%arg0: i32) -> (i32, i32) {
    %c0_i32 = arith.constant 0 : i32
    %c0_i32_0 = arith.constant 0 : i32
    %c0_i32_1 = arith.constant 0 : i32
    return %c0_i32, %c0_i32_0 : i32, i32
  }
  func.func @transform_3(%arg0: i32) -> (i32, i32) {
    %c0_i32 = arith.constant 0 : i32
    %c0_i32_0 = arith.constant 0 : i32
    %c0_i32_1 = arith.constant 0 : i32
    return %c0_i32, %c0_i32_0 : i32, i32
  }
  func.func @transform_4(%arg0: i32) -> (i32, i32) {
    %c0_i32 = arith.constant 0 : i32
    %c0_i32_0 = arith.constant 0 : i32
    %c0_i32_1 = arith.constant 0 : i32
    return %c0_i32, %c0_i32_0 : i32, i32
  }
  func.func @transform_5(%arg0: i32) -> (i32, i32, i32) {
    %c0_i32 = arith.constant 0 : i32
    %c0_i32_0 = arith.constant 0 : i32
    %c0_i32_1 = arith.constant 0 : i32
    return %arg0, %c0_i32, %c0_i32_0 : i32, i32, i32
  }
}

</mosaic_0001>

<llo_original>
// kernel: tpu_custom_call.1
$region0: #{tpu_custom_call.1}
  #allocation0 [shape = 'u32[]', space=smem, size = 0x4, offset = 0x4, fixed_abs, tag = 'smem constant byte address 0x4 - core index']
  #allocation1 [shape = 'u32[72,128]{1,0:T(1,128)}', space=vmem, size = 0x9000, scoped, tag = 'internal scratch']
  %s0 = inlined_call_operand.vmem [shape: bf16[50,32], index: 0, kind: input, shape index: {}]
  %s1 = inlined_call_operand.hbm [shape: bf16[32,64], index: 1, kind: input, shape index: {}]
  %s2 = inlined_call_operand.vmem [shape: f32[1,64], index: 2, kind: input, shape index: {}]
  %s3 = inlined_call_operand.vmem [shape: bf16[64,64], index: 3, kind: input, shape index: {}]
  %s4 = inlined_call_operand.vmem [shape: f32[1,64], index: 4, kind: input, shape index: {}]
  %s5 = inlined_call_operand.hbm [shape: f32[50,1,64], index: 5, kind: output, shape index: {}]
  %s6 = sld [smem:[#allocation0]]
  $region57: #{tpu_custom_call.1} parent=0
    _
  %s8 = ssub.s32 1, %s6
  %s9 = scalar_select 0, %s8, %s6
  $region1: #{tpu_custom_call.1} parent=0
    #allocation2 [shape = 'u8[8192]{0}', space=vmem, size = 0x2000, scoped, tag = 'input window, operand 1, single buffered']
    #allocation3 [shape = 's32[2]{0}', space=sflag, size = 0x8, scoped, tag = 'scoped memory for tpu_custom_call.1']
    #allocation4 [shape = 's32[2]{0}', space=sflag, size = 0x8, scoped, tag = 'scoped memory for tpu_custom_call.1']
    #allocation5 [shape = 'u8[16384]{0}', space=vmem, size = 0x4000, scoped, tag = 'output window, operand 0']
    %10 = vsyncpa [#allocation3], 0
    %11 = vsyncpa [#allocation4], 0
    %s12 = scalar_lea.sflag [#allocation4], 1
    %13 = vsyncpa %s12, 0
    loop: start=0, step=1, limit=6
    $region2: #{tpu_custom_call.1} parent=1 // loop_pre_header
      _
    $region3: #{tpu_custom_call.1} parent=1 // loop_header
      %s15 = sphi 0, %s19
      %p16 = scmp.ge.s32.totalorder %s15, 6
      %s25 = sphi 0, %s27
      %s28 = sphi 0, %s25
      %s29 = sphi 0, %s28
      %s45 = sphi 0, %s29
      %s49 = sphi 0, %s49
      %s51 = sphi 0, %s49
      %s52 = sphi 0, %s51
      %s66 = sphi 0, %s52
      %s70 = sphi 0, %s70
      %s72 = sphi 0, %s70
      %s73 = sphi 0, %s72
      %s87 = sphi 0, %s73
      %s91 = sphi 0, %s91
      %s93 = sphi 0, %s91
      %s94 = sphi 0, %s93
      %s108 = sphi 0, %s94
      %s112 = sphi 0, %s112
      %s114 = sphi 0, %s112
      %s115 = sphi 0, %s114
      %s129 = sphi 0, %s115
      %s135 = sphi 0, %s137
      %s138 = sphi 0, %s135
      %s139 = sphi 0, %s138
      %s155 = sphi 0, %s139
    $region4: #{tpu_custom_call.1} parent=1 // loop_header_branch
      %18 = sbr.rel (%p16) target = $region8
    $region5: #{tpu_custom_call.1} parent=1 // loop_body
      %s20 = ssub.s32 %s15, 1
      %s21 = ssub.s32 %s15, 2
      %s22 = sadd.s32 %s15, 1
      %s23 = ssub.s32 %s15, %s22
      %p24 = scmp.eq.s32.totalorder %s23, 0
      %s26 = sadd.s32 %s25, 1
      %s27 = scalar_select %p24, %s25, %s26
      %p30 = pneg %p24
      %p31 = scmp.eq.s32.totalorder %s15, 3
      %p32 = por %p30, %p31
      %p33 = scmp.ne.s32.totalorder %s25, %s28
      %p34 = scmp.eq.s32.totalorder %s15, 0
      %p35 = por %p33, %p34
      %p36 = scmp.ne.s32.totalorder %s25, %s28
      %p37 = scmp.eq.s32.totalorder %s20, 3
      %p38 = por %p36, %p37
      %p39 = scmp.ne.s32.totalorder %s28, %s29
      %p40 = scmp.eq.s32.totalorder %s20, 0
      %p41 = por %p39, %p40
      %p42 = scmp.ne.s32.totalorder %s28, %s29
      %p43 = scmp.eq.s32.totalorder %s21, 3
      %p44 = por %p42, %p43
      %p46 = scmp.ne.s32.totalorder %s29, %s45
      %p47 = scmp.eq.s32.totalorder %s21, 0
      %p48 = por %p46, %p47
      %s50 = sadd.s32 %s49, 1
      %p53 = scmp.eq.s32.totalorder %s15, 3
      %p54 = scmp.ne.s32.totalorder %s49, %s51
      %p55 = scmp.eq.s32.totalorder %s15, 0
      %p56 = por %p54, %p55
      %p57 = scmp.ne.s32.totalorder %s49, %s51
      %p58 = scmp.eq.s32.totalorder %s20, 3
      %p59 = por %p57, %p58
      %p60 = scmp.ne.s32.totalorder %s51, %s52
      %p61 = scmp.eq.s32.totalorder %s20, 0
      %p62 = por %p60, %p61
      %p63 = scmp.ne.s32.totalorder %s51, %s52
      %p64 = scmp.eq.s32.totalorder %s21, 3
      %p65 = por %p63, %p64
      %p67 = scmp.ne.s32.totalorder %s52, %s66
      %p68 = scmp.eq.s32.totalorder %s21, 0
      %p69 = por %p67, %p68
      %s71 = sadd.s32 %s70, 1
      %p74 = scmp.eq.s32.totalorder %s15, 3
      %p75 = scmp.ne.s32.totalorder %s70, %s72
      %p76 = scmp.eq.s32.totalorder %s15, 0
      %p77 = por %p75, %p76
      %p78 = scmp.ne.s32.totalorder %s70, %s72
      %p79 = scmp.eq.s32.totalorder %s20, 3
      %p80 = por %p78, %p79
      %p81 = scmp.ne.s32.totalorder %s72, %s73
      %p82 = scmp.eq.s32.totalorder %s20, 0
      %p83 = por %p81, %p82
      %p84 = scmp.ne.s32.totalorder %s72, %s73
      %p85 = scmp.eq.s32.totalorder %s21, 3
      %p86 = por %p84, %p85
      %p88 = scmp.ne.s32.totalorder %s73, %s87
      %p89 = scmp.eq.s32.totalorder %s21, 0
      %p90 = por %p88, %p89
      %s92 = sadd.s32 %s91, 1
      %p95 = scmp.eq.s32.totalorder %s15, 3
      %p96 = scmp.ne.s32.totalorder %s91, %s93
      %p97 = scmp.eq.s32.totalorder %s15, 0
      %p98 = por %p96, %p97
      %p99 = scmp.ne.s32.totalorder %s91, %s93
      %p100 = scmp.eq.s32.totalorder %s20, 3
      %p101 = por %p99, %p100
      %p102 = scmp.ne.s32.totalorder %s93, %s94
      %p103 = scmp.eq.s32.totalorder %s20, 0
      %p104 = por %p102, %p103
      %p105 = scmp.ne.s32.totalorder %s93, %s94
      %p106 = scmp.eq.s32.totalorder %s21, 3
      %p107 = por %p105, %p106
      %p109 = scmp.ne.s32.totalorder %s94, %s108
      %p110 = scmp.eq.s32.totalorder %s21, 0
      %p111 = por %p109, %p110
      %s113 = sadd.s32 %s112, 1
      %p116 = scmp.eq.s32.totalorder %s15, 3
      %p117 = scmp.ne.s32.totalorder %s112, %s114
      %p118 = scmp.eq.s32.totalorder %s15, 0
      %p119 = por %p117, %p118
      %p120 = scmp.ne.s32.totalorder %s112, %s114
      %p121 = scmp.eq.s32.totalorder %s20, 3
      %p122 = por %p120, %p121
      %p123 = scmp.ne.s32.totalorder %s114, %s115
      %p124 = scmp.eq.s32.totalorder %s20, 0
      %p125 = por %p123, %p124
      %p126 = scmp.ne.s32.totalorder %s114, %s115
      %p127 = scmp.eq.s32.totalorder %s21, 3
      %p128 = por %p126, %p127
      %p130 = scmp.ne.s32.totalorder %s115, %s129
      %p131 = scmp.eq.s32.totalorder %s21, 0
      %p132 = por %p130, %p131
      %s133 = ssub.s32 %s15, %s22
      %p134 = scmp.eq.s32.totalorder %s133, 0
      %s136 = sadd.s32 %s135, 1
      %s137 = scalar_select %p134, %s135, %s136
      %p140 = pneg %p134
      %p141 = scmp.eq.s32.totalorder %s15, 3
      %p142 = por %p140, %p141
      %p143 = scmp.ne.s32.totalorder %s135, %s138
      %p144 = scmp.eq.s32.totalorder %s15, 0
      %p145 = por %p143, %p144
      %p146 = scmp.ne.s32.totalorder %s135, %s138
      %p147 = scmp.eq.s32.totalorder %s20, 3
      %p148 = por %p146, %p147
      %p149 = scmp.ne.s32.totalorder %s138, %s139
      %p150 = scmp.eq.s32.totalorder %s20, 0
      %p151 = por %p149, %p150
      %p152 = scmp.ne.s32.totalorder %s138, %s139
      %p153 = scmp.eq.s32.totalorder %s21, 3
      %p154 = por %p152, %p153
      %p156 = scmp.ne.s32.totalorder %s139, %s155
      %p157 = scmp.eq.s32.totalorder %s21, 0
      %p158 = por %p156, %p157
      %p159 = scmp.le.s32.totalorder 1, %s15
      %p160 = scmp.lt.s32.totalorder %s15, 5
      %p161 = pnand %p159, %p160
      %p162 = pneg %p161
      // Predicated region
      $region9: #{tpu_custom_call.1} parent=5 // pred_check
        _
      $region10: #{tpu_custom_call.1} parent=5 // pred_check_branch
        %164 = sbr.rel (%p161) target = $region12
      $region11: #{tpu_custom_call.1} parent=5 // pred_region
        %s165 = ssub.s32 %s15, 1
        // Predicated region
        $region13: #{tpu_custom_call.1} parent=11 // pred_check
          %p166 = pneg %p62
        $region14: #{tpu_custom_call.1} parent=11 // pred_check_branch
          %168 = sbr.rel (%p166) target = $region16
        $region15: #{tpu_custom_call.1} parent=11 // pred_region
          %170 = vsyncadd [#allocation3], 0
          %s171 = sshll.u32 %s1, 4
          %s172 = int_to_ptr.hbm [resolvable:$true] %s171
          %s173 = sshll.u32 [#allocation2], 4
          %s174 = int_to_ptr.vmem [resolvable:$true] %s173
          %179 = dma.hbm_to_vmem [thread:$0]  %s172, 256, %s174, [#allocation3], 64, 64, 4
        $region16: #{tpu_custom_call.1} parent=11 // pred_fallthru
          _
        // Predicated region
        $region17: #{tpu_custom_call.1} parent=11 // pred_check
          %p180 = pneg %p83
        $region18: #{tpu_custom_call.1} parent=11 // pred_check_branch
          %182 = sbr.rel (%p180) target = $region20
        $region19: #{tpu_custom_call.1} parent=11 // pred_region
          _
        $region20: #{tpu_custom_call.1} parent=11 // pred_fallthru
          _
        // Predicated region
        $region21: #{tpu_custom_call.1} parent=11 // pred_check
          %p183 = pneg %p104
        $region22: #{tpu_custom_call.1} parent=11 // pred_check_branch
          %185 = sbr.rel (%p183) target = $region24
        $region23: #{tpu_custom_call.1} parent=11 // pred_region
          _
        $region24: #{tpu_custom_call.1} parent=11 // pred_fallthru
          _
        // Predicated region
        $region25: #{tpu_custom_call.1} parent=11 // pred_check
          %p186 = pneg %p125
        $region26: #{tpu_custom_call.1} parent=11 // pred_check_branch
          %188 = sbr.rel (%p186) target = $region28
        $region27: #{tpu_custom_call.1} parent=11 // pred_region
          _
        $region28: #{tpu_custom_call.1} parent=11 // pred_fallthru
          _
      $region12: #{tpu_custom_call.1} parent=5 // pred_fallthru
        _
      %p189 = scmp.lt.s32.totalorder %s15, 4
      // Predicated region
      $region29: #{tpu_custom_call.1} parent=5 // pred_check
        %p190 = pneg %p189
      $region30: #{tpu_custom_call.1} parent=5 // pred_check_branch
        %192 = sbr.rel (%p190) target = $region32
      $region31: #{tpu_custom_call.1} parent=5 // pred_region
        // Predicated region
        $region33: #{tpu_custom_call.1} parent=31 // pred_check
          %p193 = pneg %p35
        $region34: #{tpu_custom_call.1} parent=31 // pred_check_branch
          %195 = sbr.rel (%p193) target = $region36
        $region35: #{tpu_custom_call.1} parent=31 // pred_region
          %s196 = smul.u32 2, %s15
          %s197 = ssub.s32 7, %s196
          %p198 = scmp.lt.s32.totalorder %s197, 2
          %s199 = scalar_select %p198, %s197, 2
          %s200 = smul.u32 4, %s199
          %p201 = scmp.lt.s32.totalorder %s196, 6
          %s202 = scalar_select %p201, %s196, 6
          %s203 = smul.addr %s202, 4
          %s204 = scalar_lea.vmem %s0, %s203
          %s205 = smul.u32 2, %s15
          %s206 = ssub.s32 7, %s205
          %p207 = scmp.lt.s32.totalorder %s206, 2
          %s208 = scalar_select %p207, %s206, 2
          %s209 = smul.u32 4, %s208
        $region36: #{tpu_custom_call.1} parent=31 // pred_fallthru
          _
      $region32: #{tpu_custom_call.1} parent=5 // pred_fallthru
        _
      %p210 = scmp.le.s32.totalorder 1, %s15
      %p211 = scmp.lt.s32.totalorder %s15, 5
      %p212 = pnand %p210, %p211
      %p213 = pneg %p212
      // Predicated region
      $region37: #{tpu_custom_call.1} parent=5 // pred_check
        _
      $region38: #{tpu_custom_call.1} parent=5 // pred_check_branch
        %215 = sbr.rel (%p212) target = $region40
      $region39: #{tpu_custom_call.1} parent=5 // pred_region
        %s216 = ssub.s32 %s15, 1
        // Predicated region
        $region41: #{tpu_custom_call.1} parent=39 // pred_check
          %p217 = pneg %p62
        $region42: #{tpu_custom_call.1} parent=39 // pred_check_branch
          %219 = sbr.rel (%p217) target = $region44
        $region43: #{tpu_custom_call.1} parent=39 // pred_region
          %221 = dma.done [#allocation3], 256
        $region44: #{tpu_custom_call.1} parent=39 // pred_fallthru
          _
        %s222 = smul.u32 2, %s20
        %s223 = ssub.s32 7, %s222
        %p224 = scmp.lt.s32.totalorder %s223, 2
        %s225 = scalar_select %p224, %s223, 2
        %s226 = smul.u32 4, %s225
        %p227 = scmp.lt.s32.totalorder %s222, 6
        %s228 = scalar_select %p227, %s222, 6
        %s229 = smul.addr %s228, 4
        %s230 = scalar_lea.vmem %s0, %s229
        %p231 = pneg %p41
        %p232 = pneg %p38
        %p233 = pneg %p62
        %p234 = pneg %p59
        %p235 = pneg %p83
        %p236 = pneg %p80
        %p237 = pneg %p104
        %p238 = pneg %p101
        %p239 = pneg %p125
        %p240 = pneg %p122
        %p241 = pneg %p151
        %p242 = pneg %p148
        %s243 = sand.u32 %s138, 1
        %s244 = scalar_lea.sflag [#allocation4], %s243
        %s245 = sand.u32 %s138, 1
        %s246 = smul.addr %s245, 16
        %s247 = scalar_lea.vmem [#allocation5], %s246
        %s248 = smul.u32 2, %s20
        %s249 = ssub.s32 7, %s248
        %p250 = scmp.lt.s32.totalorder %s249, 2
        %s251 = scalar_select %p250, %s249, 2
        %s252 = smul.u32 4, %s251
        %p253 = scmp.lt.s32.totalorder %s248, 6
        %s254 = scalar_select %p253, %s248, 6
        %s255 = smul.addr %s254, 4
        %s256 = scalar_lea.vmem %s0, %s255
        %s257 = smul.u32 2, %s20
        %s258 = ssub.s32 7, %s257
        %p259 = scmp.lt.s32.totalorder %s258, 2
        %s260 = scalar_select %p259, %s258, 2
        %s261 = smul.u32 4, %s260
        %s262 = smul.u32 16, %s20
        %s263 = ssub.s32 50, %s262
        %p264 = scmp.lt.s32.totalorder %s263, 16
        %s265 = scalar_select %p264, %s263, 16
        %v267 = vld [vmem:[%s256] sm:$0xf]
        %v268 = vld [vmem:[%s256 + $0x4] sm:$0xf]
        %v269 = vld [vmem:[#allocation2] sm:$0xf]
        %v270 = vld [vmem:[#allocation2 + $0x4] sm:$0xf]
        %v271 = vld [vmem:[#allocation2 + $0x8] sm:$0xf]
        %v272 = vld [vmem:[#allocation2 + $0xc] sm:$0xf]
        %v273 = vld [vmem:[%s2] sm:$0x1]
        %v275 = vperm.slane %v273, 0
        %v279 = vunpack.c.l.b16 %v267
        %v280 = vunpack.c.l.b16 %v268
        %v281 = vpack.c.b16 %v280, %v279
        %v286 = vunpack.c.l.b16 %v269
        %v287 = vunpack.c.l.b16 %v270
        %v288 = vunpack.c.l.b16 %v271
        %v289 = vunpack.c.l.b16 %v272
        %v290 = vpack.c.b16 %v287, %v286
        %v291 = vpack.c.b16 %v289, %v288
        %vm294 = vcmask 261120
        %v296 = vsel %vm294, %v281, 0
        %298 = vmatpush.bf16.msra.mxu0 0
        %299 = vmatpush.bf16.msra.mxu0 0
        %300 = vmatpush.bf16.msra.mxu0 0
        %301 = vmatpush.bf16.msra.mxu0 0
        %302 = vmatpush.bf16.msra.mxu0 0
        %303 = vmatpush.bf16.msra.mxu0 0
        %304 = vmatpush.bf16.msra.mxu0 %v291
        %305 = vmatpush.bf16.msra.mxu0 %v290
        %306 = vmatmul.bf16.gmra.mxu0 %v296
        %v307 = vpop.f32.mrf.mxu0
        %v308 = vadd.f32 %v275, %v307
        %v309 = vpop.f32.mrf.mxu0
        %v310 = vadd.f32 %v275, %v309
        %311 = vdwg.mxu0
        %v312 = vmax.f32 %v308, 0.0
        %v313 = vmax.f32 %v310, 0.0
        %v314 = vpack.c.bf16 %v313, %v312
        %v315 = vld [vmem:[%s3] sm:$0xf]
        %v316 = vld [vmem:[%s3 + $0x4] sm:$0xf]
        %v317 = vld [vmem:[%s3 + $0x8] sm:$0xf]
        %v318 = vld [vmem:[%s3 + $0xc] sm:$0xf]
        %v319 = vld [vmem:[%s3 + $0x10] sm:$0xf]
        %v320 = vld [vmem:[%s3 + $0x14] sm:$0xf]
        %v321 = vld [vmem:[%s3 + $0x18] sm:$0xf]
        %v322 = vld [vmem:[%s3 + $0x1c] sm:$0xf]
        %v323 = vld [vmem:[%s4] sm:$0x1]
        %v325 = vperm.slane %v323, 0
        %v335 = vunpack.c.l.b16 %v315
        %v336 = vunpack.c.l.b16 %v316
        %v337 = vunpack.c.l.b16 %v317
        %v338 = vunpack.c.l.b16 %v318
        %v339 = vunpack.c.l.b16 %v319
        %v340 = vunpack.c.l.b16 %v320
        %v341 = vunpack.c.l.b16 %v321
        %v342 = vunpack.c.l.b16 %v322
        %v343 = vpack.c.b16 %v336, %v335
        %v344 = vpack.c.b16 %v338, %v337
        %v345 = vpack.c.b16 %v340, %v339
        %v346 = vpack.c.b16 %v342, %v341
        %vm351 = vcmask 523264
        %v353 = vsel %vm351, %v314, 0
        %355 = vmatpush.bf16.msra.mxu0 0
        %356 = vmatpush.bf16.msra.mxu0 0
        %357 = vmatpush.bf16.msra.mxu0 0
        %358 = vmatpush.bf16.msra.mxu0 0
        %359 = vmatpush.bf16.msra.mxu0 %v346
        %360 = vmatpush.bf16.msra.mxu0 %v345
        %361 = vmatpush.bf16.msra.mxu0 %v344
        %362 = vmatpush.bf16.msra.mxu0 %v343
        %363 = vmatmul.bf16.gmra.mxu0 %v353
        %v364 = vpop.f32.mrf.mxu0
        %v365 = vadd.f32 %v325, %v364
        %v366 = vpop.f32.mrf.mxu0
        %v367 = vadd.f32 %v325, %v366
        %368 = vdwg.mxu0
        %v369 = vtanh.pop %v365
        %v370 = vtanh.pop %v367
        %v373 = vrot.slane %v369, 1
        %v374 = vrot.slane %v369, 2
        %v375 = vrot.slane %v369, 3
        %v376 = vrot.slane %v369, 4
        %v377 = vrot.slane %v369, 5
        %v378 = vrot.slane %v369, 6
        %v379 = vrot.slane %v369, 7
        %v380 = vrot.slane %v370, 1
        %v381 = vrot.slane %v370, 2
        %v382 = vrot.slane %v370, 3
        %v383 = vrot.slane %v370, 4
        %v384 = vrot.slane %v370, 5
        %v385 = vrot.slane %v370, 6
        %v386 = vrot.slane %v370, 7
        %vm401 = vcmask 516096
        %402 = vst.msk [vmem:[%s247] sm:$0x1] %vm401, %v369
        %403 = vst.msk [vmem:[%s247 + $0x1] sm:$0x1] %vm401, %v373
        %404 = vst.msk [vmem:[%s247 + $0x2] sm:$0x1] %vm401, %v374
        %405 = vst.msk [vmem:[%s247 + $0x3] sm:$0x1] %vm401, %v375
        %406 = vst.msk [vmem:[%s247 + $0x4] sm:$0x1] %vm401, %v376
        %407 = vst.msk [vmem:[%s247 + $0x5] sm:$0x1] %vm401, %v377
        %408 = vst.msk [vmem:[%s247 + $0x6] sm:$0x1] %vm401, %v378
        %409 = vst.msk [vmem:[%s247 + $0x7] sm:$0x1] %vm401, %v379
        %410 = vst.msk [vmem:[%s247 + $0x8] sm:$0x1] %vm401, %v370
        %411 = vst.msk [vmem:[%s247 + $0x9] sm:$0x1] %vm401, %v380
        %412 = vst.msk [vmem:[%s247 + $0xa] sm:$0x1] %vm401, %v381
        %413 = vst.msk [vmem:[%s247 + $0xb] sm:$0x1] %vm401, %v382
        %414 = vst.msk [vmem:[%s247 + $0xc] sm:$0x1] %vm401, %v383
        %415 = vst.msk [vmem:[%s247 + $0xd] sm:$0x1] %vm401, %v384
        %416 = vst.msk [vmem:[%s247 + $0xe] sm:$0x1] %vm401, %v385
        %417 = vst.msk [vmem:[%s247 + $0xf] sm:$0x1] %vm401, %v386
        %s418 = sand.u32 %s138, 1
        %s419 = scalar_lea.sflag [#allocation4], %s418
        %s420 = sand.u32 %s138, 1
        %s421 = smul.addr %s420, 16
        %s422 = scalar_lea.vmem [#allocation5], %s421
        // Predicated region
        $region45: #{tpu_custom_call.1} parent=39 // pred_check
          %p423 = pneg %p148
        $region46: #{tpu_custom_call.1} parent=39 // pred_check_branch
          %425 = sbr.rel (%p423) target = $region48
        $region47: #{tpu_custom_call.1} parent=39 // pred_region
          %s426 = smul.u32 16, %s20
          %s427 = ssub.s32 50, %s426
          %p428 = scmp.lt.s32.totalorder %s427, 16
          %s429 = scalar_select %p428, %s427, 16
          %s430 = ssub.s32 16, %s429
          %s431 = sshll.u32 %s430, 4
          %432 = vsyncadd %s419, %s431
          %p433 = scmp.ne.s32.totalorder 0, %s429
          %s434 = scalar_lea.hbm %s5, %s426
          %s435 = sshll.u32 %s422, 4
          %s436 = int_to_ptr.vmem [resolvable:$true] %s435
          %s437 = sshll.u32 %s434, 4
          %s438 = int_to_ptr.hbm [resolvable:$true] %s437
          %s439 = sshll.u32 %s429, 4
          %443 = dma.vmem_to_hbm [thread:$0]  (%p433), %s436, %s439, %s438, %s419, 16, 16, 1
        $region48: #{tpu_custom_call.1} parent=39 // pred_fallthru
          _
      $region40: #{tpu_custom_call.1} parent=5 // pred_fallthru
        _
      %p444 = scmp.le.s32.totalorder 2, %s15
      // Predicated region
      $region49: #{tpu_custom_call.1} parent=5 // pred_check
        %p445 = pneg %p444
      $region50: #{tpu_custom_call.1} parent=5 // pred_check_branch
        %447 = sbr.rel (%p445) target = $region52
      $region51: #{tpu_custom_call.1} parent=5 // pred_region
        %s448 = ssub.s32 %s15, 2
        // Predicated region
        $region53: #{tpu_custom_call.1} parent=51 // pred_check
          %p449 = pneg %p154
        $region54: #{tpu_custom_call.1} parent=51 // pred_check_branch
          %451 = sbr.rel (%p449) target = $region56
        $region55: #{tpu_custom_call.1} parent=51 // pred_region
          %s452 = sand.u32 %s139, 1
          %s453 = scalar_lea.sflag [#allocation4], %s452
          %s454 = sand.u32 %s139, 1
          %s455 = smul.addr %s454, 16
          %s456 = scalar_lea.vmem [#allocation5], %s455
          %458 = dma.done %s453, 256
        $region56: #{tpu_custom_call.1} parent=51 // pred_fallthru
          _
      $region52: #{tpu_custom_call.1} parent=5 // pred_fallthru
        _
    $region6: #{tpu_custom_call.1} parent=1 // loop_footer
      %s19 = sadd.s32 1, %s15
    $region7: #{tpu_custom_call.1} parent=1 // loop_footer_branch
      %14 = sbr.rel target = $region3
    $region8: #{tpu_custom_call.1} parent=1 // loop_exit
      _
    %459 = vsyncpa [#allocation3], 1
    %s460 = scalar_lea.sflag [#allocation3], 1
    %461 = vsyncpa %s460, 1
    %462 = vsyncpa [#allocation4], 1
    %s463 = scalar_lea.sflag [#allocation4], 1
    %464 = vsyncpa %s463, 1

</llo_original>
